<compile_context>
chip_gen: v6e
topology: v6e:2x2x1
jax: 0.10.0
libtpu: 0.0.40
codegen_flags: <defaults>
</compile_context>

<pallas_src>
import functools

import jax
import jax.numpy as jnp
from jax import lax
from jax.experimental import pallas as pl
from jax.experimental.pallas import tpu as pltpu


# ----------------------------------------------------------------------------
# Fused Pallas kernel (one "super-batch" = `groups` batch elements per grid step)
# ----------------------------------------------------------------------------
def _fused_tcn_kernel(x_ref, q_ref, w_ref, b_ref, hw_ref, hb_ref, o_ref, buf,
                      *, geom, pad, ksize, groups, d_in, d_group, d_pad, out_len):
    """x_ref/q_ref : (groups, L, d_in)       raw inputs for this super-batch
       w_ref       : (num_layers*K, d_pad, d_pad)  block-diagonal conv weights (bf16)
       b_ref       : (num_layers, 1, d_pad)  conv biases (f32, group-tiled)
       hw_ref      : (d_pad, d_pad)          forecast-head weight (bf16, block-diag)
       hb_ref      : (1, d_pad)              forecast-head bias (f32)
       o_ref       : (1, out_len, d_pad)     lane-dense output block
       buf         : (l_buf, d_pad) f32      resident activation buffer (with conv halo)
       geom        : static tuple of (l_in, l_out, dilation) per conv layer.
    """
    f32 = jnp.float32
    bf16 = jnp.bfloat16

    def zero_halo(l_in):
        # Zero only the rows the taps can read but that are not overwritten with data:
        # left pad rows [0, pad) and right pad rows [pad+l_in, pad+l_in+pad).
        # Together with the data write [pad, pad+l_in) this covers the full
        # tap-reachable range [0, l_in + 2*pad), so no stale VMEM can leak in.
        if pad > 0:
            z = jnp.zeros((pad, d_pad), f32)
            buf[0:pad, :] = z
            buf[pad + l_in:pad + l_in + pad, :] = z

    # ---- Layer-0 staging: residual add + lane packing done entirely in VMEM ----
    l0 = geom[0][0]
    if d_group < d_pad:
        # Padded lanes of the data rows must also be zero -> zero the whole buffer once.
        buf[...] = jnp.zeros_like(buf)
    else:
        zero_halo(l0)
    for g in range(groups):
        buf[pad:pad + l0, g * d_in:(g + 1) * d_in] = (
            x_ref[g].astype(f32) + q_ref[g].astype(f32))

    # ---- Dilated conv stack (static unroll; activations stay resident in VMEM) ----
    h = None
    for li, (l_in, l_out, dil) in enumerate(geom):
        if li > 0:
            zero_halo(l_in)
            buf[pad:pad + l_in, :] = h           # h already has zeros on padded lanes
        # K accumulating dots instead of an im2col concatenate.
        acc = jnp.dot(buf[0:l_out, :].astype(bf16), w_ref[li * ksize],
                      preferred_element_type=f32)
        for k in range(1, ksize):
            acc = acc + jnp.dot(buf[k * dil:k * dil + l_out, :].astype(bf16),
                                w_ref[li * ksize + k], preferred_element_type=f32)
        h = acc + b_ref[li]
        # TODO(synk): F.dropout (training mode) not implemented; identity at inference.

    # ---- Forecast head (1x1 conv) fused with the final [:, :seq_len] slice ----
    y = jnp.dot(h[:out_len, :].astype(bf16), hw_ref[...],
                preferred_element_type=f32) + hb_ref[...]
    o_ref[0] = y.astype(o_ref.dtype)             # lane-dense (out_len, d_pad) store


# ----------------------------------------------------------------------------
# Weight packing: torch (Cout, Cin, K) -> block-diagonal (groups copies) bf16
# ----------------------------------------------------------------------------
def _block_diag(w_io, groups, d_pad, dtype):
    gd = groups * w_io.shape[0]
    bd = jnp.kron(jnp.eye(groups, dtype=w_io.dtype), w_io)      # (gd, gd) block diag
    bd = jnp.pad(bd, ((0, d_pad - gd), (0, d_pad - gd)))
    return bd.astype(dtype)


def _pack_params(params, *, groups, d_pad, weight_dtype=jnp.bfloat16):
    d_model = params["convs"][0][0].shape[0]
    gd = groups * d_model

    conv_w, conv_b = [], []
    for (w, b) in params["convs"]:                               # w: (Cout, Cin, K)
        K = w.shape[-1]
        for k in range(K):
            conv_w.append(_block_diag(w[:, :, k].T, groups, d_pad, weight_dtype))
        conv_b.append(jnp.pad(jnp.tile(b, groups), (0, d_pad - gd))
                      .reshape(1, d_pad).astype(jnp.float32))
    w_pack = jnp.stack(conv_w)                                   # (num_layers*K, d_pad, d_pad)
    b_pack = jnp.stack(conv_b)                                   # (num_layers, 1, d_pad)

    hw, hb = params["forecast_head"]                             # (D, D, 1), (D,)
    head_w = _block_diag(hw[:, :, 0].T, groups, d_pad, weight_dtype)
    head_b = (jnp.pad(jnp.tile(hb, groups), (0, d_pad - gd))
              .reshape(1, d_pad).astype(jnp.float32))
    return w_pack, b_pack, head_w, head_b


# ----------------------------------------------------------------------------
# Wrapper
# ----------------------------------------------------------------------------
def tcn_decoder_forward(params, x, query, *, kernel_size):
    """x, query: (B, seq_len, d_model). Returns (B, out_len, d_model)."""
    B, L, D = x.shape
    K = kernel_size
    pad = K - 1
    num_layers = len(params["convs"])

    # Lane packing: put `groups` batch elements side by side on the 128-lane axis.
    if D < 128 and 128 % D == 0:
        groups = max(1, min(128 // D, B))
    else:
        groups = 1
    d_group = groups * D
    d_pad = ((d_group + 127) // 128) * 128
    B_pad = ((B + groups - 1) // groups) * groups
    SB = B_pad // groups                   # super-batches == grid length
    # NOTE: on v7x (2 TCs) SB should be >= 2 for megacore utilization; with tiny test
    # batches the grid degenerates to a single step, which is still correct.

    # Static per-layer geometry (torch Conv1d: L_out = L_in + 2*pad - dil*(K-1)).
    geom, l_cur = [], L
    for i in range(num_layers):
        dil = 2 ** i
        l_out = l_cur + 2 * pad - dil * (K - 1)
        geom.append((l_cur, l_out, dil))
        l_cur = l_out
    out_len = min(l_cur, L)                # torch slices to seq_len only if longer
    l_buf = max(l_in + 2 * pad for (l_in, _, _) in geom)
    l_buf = max(8, ((l_buf + 7) // 8) * 8)

    # One-time packing to the kernel layout (bf16 block-diagonal weights).
    w_pack, b_pack, head_w, head_b = _pack_params(params, groups=groups, d_pad=d_pad)

    # Batch pad only (no channel/lane pad in HBM; that happens in VMEM in the kernel).
    if B_pad != B:
        x = jnp.pad(x, ((0, B_pad - B), (0, 0), (0, 0)))
        query = jnp.pad(query, ((0, B_pad - B), (0, 0), (0, 0)))

    kernel = functools.partial(
        _fused_tcn_kernel, geom=tuple(geom), pad=pad, ksize=K, groups=groups,
        d_in=D, d_group=d_group, d_pad=d_pad, out_len=out_len)

    # VMEM budget: double-buffered inputs/weights/output + scratch + temporaries.
    footprint = (2 * 2 * groups * L * D * 4
                 + 2 * (w_pack.size * 2 + b_pack.size * 4
                        + head_w.size * 2 + head_b.size * 4)
                 + 2 * out_len * d_pad * 4
                 + 5 * l_buf * d_pad * 4)
    vmem_limit = int(min(96 * 2 ** 20, max(32 * 2 ** 20, 2 * footprint)))

    out = pl.pallas_call(
        kernel,
        out_shape=jax.ShapeDtypeStruct((SB, out_len, d_pad), x.dtype),
        grid_spec=pltpu.PrefetchScalarGridSpec(
            num_scalar_prefetch=0,
            grid=(SB,),
            in_specs=[
                pl.BlockSpec((groups, L, D), lambda sb: (sb, 0, 0)),   # x
                pl.BlockSpec((groups, L, D), lambda sb: (sb, 0, 0)),   # query
                pl.BlockSpec(w_pack.shape, lambda sb: (0, 0, 0)),      # conv weights
                pl.BlockSpec(b_pack.shape, lambda sb: (0, 0, 0)),      # conv biases
                pl.BlockSpec(head_w.shape, lambda sb: (0, 0)),         # head weight
                pl.BlockSpec(head_b.shape, lambda sb: (0, 0)),         # head bias
            ],
            out_specs=pl.BlockSpec((1, out_len, d_pad), lambda sb: (sb, 0, 0)),
            scratch_shapes=[pltpu.VMEM((l_buf, d_pad), jnp.float32)],
        ),
        compiler_params=pltpu.CompilerParams(
            dimension_semantics=("parallel",),
            vmem_limit_bytes=vmem_limit),
    )(x, query, w_pack, b_pack, head_w, head_b)

    # Un-pack lanes -> batch (wrapper-side layout plumbing; kernel stores stay lane-dense).
    out = out[:, :, :d_group].reshape(SB, out_len, groups, D)
    out = jnp.transpose(out, (0, 2, 1, 3)).reshape(SB * groups, out_len, D)
    return out[:B]


# ----------------------------------------------------------------------------
# Params: PyTorch-style init (raw torch layout; kernel packing done in wrapper)
# ----------------------------------------------------------------------------
def init_params(key, d_model, num_layers, kernel_size):
    def conv_init(k, cout, cin, ksz):
        kw, kb = jax.random.split(k)
        bound = 1.0 / float(cin * ksz) ** 0.5      # PyTorch default init range
        w = jax.random.uniform(kw, (cout, cin, ksz), jnp.float32, -bound, bound)
        b = jax.random.uniform(kb, (cout,), jnp.float32, -bound, bound)
        return w, b

    keys = jax.random.split(key, num_layers + 2)
    convs = [conv_init(keys[i], d_model, d_model, kernel_size)
             for i in range(num_layers)]
    head = conv_init(keys[num_layers], d_model, d_model, 1)
    # output_layer is defined in the torch __init__ but never used in forward():
    out_layer = conv_init(keys[num_layers + 1], 1, d_model, 1)
    return {"convs": convs, "forecast_head": head, "output_layer": out_layer}


# ----------------------------------------------------------------------------
# Pure-JAX reference (mirrors the torch forward; weights bf16-rounded to match kernel)
# ----------------------------------------------------------------------------
def _ref_conv1d(x_ncl, w_oik, bias, dilation, padding):
    y = lax.conv_general_dilated(
        x_ncl, w_oik, window_strides=(1,), padding=[(padding, padding)],
        rhs_dilation=(dilation,), dimension_numbers=("NCH", "OIH", "NCH"))
    return y + bias[None, :, None]


def reference_forward(params, x, query, *, kernel_size):
    q = lambda w: w.astype(jnp.bfloat16).astype(jnp.float32)   # match kernel weight dtype
    h = jnp.transpose(x + query, (0, 2, 1))                    # (B, D, L)
    seq_len = h.shape[2]
    for i, (w, b) in enumerate(params["convs"]):
        h = _ref_conv1d(h, q(w), b, 2 ** i, kernel_size - 1)
    w, b = params["forecast_head"]
    h = _ref_conv1d(h, q(w), b, 1, 0)
    if h.shape[2] > seq_len:
        h = h[:, :, :seq_len]
    return jnp.transpose(h, (0, 2, 1))


# ----------------------------------------------------------------------------
if __name__ == "__main__":
    B, L, D = 2, 16, 32
    num_layers, ksize = 2, 3

    key = jax.random.PRNGKey(0)
    kx, kq, kp = jax.random.split(key, 3)
    x = jax.random.normal(kx, (B, L, D), jnp.float32)
    query = jax.random.normal(kq, (B, L, D), jnp.float32)
    params = init_params(kp, D, num_layers, ksize)

    out = tcn_decoder_forward(params, x, query, kernel_size=ksize)
    out = jax.block_until_ready(out)

    ref = reference_forward(params, x, query, kernel_size=ksize)
    assert out.shape == ref.shape, (out.shape, ref.shape)
    max_err = float(jnp.max(jnp.abs(out - ref)))
    # bf16 activations/weights in the kernel (f32 accumulation) -> loosened tolerance.
    assert jnp.allclose(out, ref, atol=5e-2, rtol=5e-2), max_err

    print("KERNEL_OK")
</pallas_src>

<mosaic_0001>
module attributes {stable_mosaic.version = 11 : i64} {
  func.func @_fused_tcn_kernel(%arg0: i32, %arg1: memref<2x16x32xf32, #tpu.memory_space<vmem>>, %arg2: memref<2x16x32xf32, #tpu.memory_space<vmem>>, %arg3: memref<6x128x128xbf16, #tpu.memory_space<vmem>>, %arg4: memref<2x1x128xf32, #tpu.memory_space<vmem>>, %arg5: memref<128x128xbf16, #tpu.memory_space<vmem>>, %arg6: memref<1x128xf32, #tpu.memory_space<vmem>>, %arg7: memref<1x16x128xf32, #tpu.memory_space<vmem>>, %arg8: memref<24x128xf32, #tpu.memory_space<vmem>>) attributes {dimension_semantics = [#tpu.dimension_semantics<parallel>], iteration_bounds = array<i64: 1>, scalar_prefetch = 0 : i64, scratch_operands = 1 : i64, tpu.core_type = #tpu.core_type<tc>, window_params = [{transform_indices = @transform_0, window_bounds = array<i64: 2, 16, 32>}, {transform_indices = @transform_1, window_bounds = array<i64: 2, 16, 32>}, {pipeline_mode = #tpu.pipeline_mode<synchronous>, transform_indices = @transform_2, window_bounds = array<i64: 6, 128, 128>}, {pipeline_mode = #tpu.pipeline_mode<synchronous>, transform_indices = @transform_3, window_bounds = array<i64: 2, 1, 128>}, {pipeline_mode = #tpu.pipeline_mode<synchronous>, transform_indices = @transform_4, window_bounds = array<i64: 128, 128>}, {pipeline_mode = #tpu.pipeline_mode<synchronous>, transform_indices = @transform_5, window_bounds = array<i64: 1, 128>}, {transform_indices = @transform_6, window_bounds = array<i64: 1, 16, 128>}]} {
    %cst = arith.constant 0.000000e+00 : f32
    %0 = vector.broadcast %cst : f32 to vector<24x128xf32>
    %c0 = arith.constant 0 : index
    %c0_0 = arith.constant 0 : index
    %1 = vector.load %arg8[%c0, %c0_0] : memref<24x128xf32, #tpu.memory_space<vmem>>, vector<24x128xf32>
    tpu.vector_store %arg8[%c0, %c0_0], %0 {strides = array<i32>} : memref<24x128xf32, #tpu.memory_space<vmem>>, vector<24x128xf32>,
    %c0_1 = arith.constant 0 : index
    %c0_2 = arith.constant 0 : index
    %c0_3 = arith.constant 0 : index
    %2 = vector.load %arg1[%c0_1, %c0_2, %c0_3] : memref<2x16x32xf32, #tpu.memory_space<vmem>>, vector<1x16x32xf32>
    %3 = vector.shape_cast %2 : vector<1x16x32xf32> to vector<16x32xf32>
    %c0_4 = arith.constant 0 : index
    %c0_5 = arith.constant 0 : index
    %c0_6 = arith.constant 0 : index
    %4 = vector.load %arg2[%c0_4, %c0_5, %c0_6] : memref<2x16x32xf32, #tpu.memory_space<vmem>>, vector<1x16x32xf32>
    %5 = vector.shape_cast %4 : vector<1x16x32xf32> to vector<16x32xf32>
    %6 = arith.addf %3, %5 : vector<16x32xf32>
    %c2 = arith.constant 2 : index
    %c0_7 = arith.constant 0 : index
    %7 = vector.load %arg8[%c2, %c0_7] : memref<24x128xf32, #tpu.memory_space<vmem>>, vector<16x32xf32>
    tpu.vector_store %arg8[%c2, %c0_7], %6 {strides = array<i32>} : memref<24x128xf32, #tpu.memory_space<vmem>>, vector<16x32xf32>,
    %c1 = arith.constant 1 : index
    %c0_8 = arith.constant 0 : index
    %c0_9 = arith.constant 0 : index
    %8 = vector.load %arg1[%c1, %c0_8, %c0_9] : memref<2x16x32xf32, #tpu.memory_space<vmem>>, vector<1x16x32xf32>
    %9 = vector.shape_cast %8 : vector<1x16x32xf32> to vector<16x32xf32>
    %c1_10 = arith.constant 1 : index
    %c0_11 = arith.constant 0 : index
    %c0_12 = arith.constant 0 : index
    %10 = vector.load %arg2[%c1_10, %c0_11, %c0_12] : memref<2x16x32xf32, #tpu.memory_space<vmem>>, vector<1x16x32xf32>
    %11 = vector.shape_cast %10 : vector<1x16x32xf32> to vector<16x32xf32>
    %12 = arith.addf %9, %11 : vector<16x32xf32>
    %c2_13 = arith.constant 2 : index
    %c32 = arith.constant 32 : index
    %13 = vector.load %arg8[%c2_13, %c32] : memref<24x128xf32, #tpu.memory_space<vmem>>, vector<16x32xf32>
    tpu.vector_store %arg8[%c2_13, %c32], %12 {strides = array<i32>} : memref<24x128xf32, #tpu.memory_space<vmem>>, vector<16x32xf32>,
    %c0_14 = arith.constant 0 : index
    %c0_15 = arith.constant 0 : index
    %14 = vector.load %arg8[%c0_14, %c0_15] : memref<24x128xf32, #tpu.memory_space<vmem>>, vector<18x128xf32>
    %15 = arith.truncf %14 : vector<18x128xf32> to vector<18x128xbf16>
    %c0_16 = arith.constant 0 : index
    %c0_17 = arith.constant 0 : index
    %c0_18 = arith.constant 0 : index
    %16 = vector.load %arg3[%c0_16, %c0_17, %c0_18] : memref<6x128x128xbf16, #tpu.memory_space<vmem>>, vector<1x128x128xbf16>
    %17 = vector.shape_cast %16 : vector<1x128x128xbf16> to vector<128x128xbf16>
    %cst_19 = arith.constant dense<0.000000e+00> : vector<18x128xf32>
    %18 = tpu.matmul %15, %17, %cst_19 {dimension_numbers = #tpu.dot_dimension_numbers<[1], [0], [0], [1], [0, 0, 1, 1], [], []>} : vector<18x128xbf16>, vector<128x128xbf16>, vector<18x128xf32> -> vector<18x128xf32>
    %c1_20 = arith.constant 1 : index
    %c0_21 = arith.constant 0 : index
    %19 = vector.load %arg8[%c1_20, %c0_21] : memref<24x128xf32, #tpu.memory_space<vmem>>, vector<18x128xf32>
    %20 = arith.truncf %19 : vector<18x128xf32> to vector<18x128xbf16>
    %c1_22 = arith.constant 1 : index
    %c0_23 = arith.constant 0 : index
    %c0_24 = arith.constant 0 : index
    %21 = vector.load %arg3[%c1_22, %c0_23, %c0_24] : memref<6x128x128xbf16, #tpu.memory_space<vmem>>, vector<1x128x128xbf16>
    %22 = vector.shape_cast %21 : vector<1x128x128xbf16> to vector<128x128xbf16>
    %cst_25 = arith.constant dense<0.000000e+00> : vector<18x128xf32>
    %23 = tpu.matmul %20, %22, %cst_25 {dimension_numbers = #tpu.dot_dimension_numbers<[1], [0], [0], [1], [0, 0, 1, 1], [], []>} : vector<18x128xbf16>, vector<128x128xbf16>, vector<18x128xf32> -> vector<18x128xf32>
    %24 = arith.addf %18, %23 : vector<18x128xf32>
    %c2_26 = arith.constant 2 : index
    %c0_27 = arith.constant 0 : index
    %25 = vector.load %arg8[%c2_26, %c0_27] : memref<24x128xf32, #tpu.memory_space<vmem>>, vector<18x128xf32>
    %26 = arith.truncf %25 : vector<18x128xf32> to vector<18x128xbf16>
    %c2_28 = arith.constant 2 : index
    %c0_29 = arith.constant 0 : index
    %c0_30 = arith.constant 0 : index
    %27 = vector.load %arg3[%c2_28, %c0_29, %c0_30] : memref<6x128x128xbf16, #tpu.memory_space<vmem>>, vector<1x128x128xbf16>
    %28 = vector.shape_cast %27 : vector<1x128x128xbf16> to vector<128x128xbf16>
    %cst_31 = arith.constant dense<0.000000e+00> : vector<18x128xf32>
    %29 = tpu.matmul %26, %28, %cst_31 {dimension_numbers = #tpu.dot_dimension_numbers<[1], [0], [0], [1], [0, 0, 1, 1], [], []>} : vector<18x128xbf16>, vector<128x128xbf16>, vector<18x128xf32> -> vector<18x128xf32>
    %30 = arith.addf %24, %29 : vector<18x128xf32>
    %c0_32 = arith.constant 0 : index
    %c0_33 = arith.constant 0 : index
    %c0_34 = arith.constant 0 : index
    %31 = vector.load %arg4[%c0_32, %c0_33, %c0_34] : memref<2x1x128xf32, #tpu.memory_space<vmem>>, vector<1x1x128xf32>
    %32 = vector.shape_cast %31 : vector<1x1x128xf32> to vector<1x128xf32>
    %33 = vector.broadcast %32 : vector<1x128xf32> to vector<18x128xf32>
    %34 = arith.addf %30, %33 : vector<18x128xf32>
    %cst_35 = arith.constant 0.000000e+00 : f32
    %35 = vector.broadcast %cst_35 : f32 to vector<2x128xf32>
    %c0_36 = arith.constant 0 : index
    %c0_37 = arith.constant 0 : index
    %36 = vector.load %arg8[%c0_36, %c0_37] : memref<24x128xf32, #tpu.memory_space<vmem>>, vector<2x128xf32>
    tpu.vector_store %arg8[%c0_36, %c0_37], %35 {strides = array<i32>} : memref<24x128xf32, #tpu.memory_space<vmem>>, vector<2x128xf32>,
    %c20 = arith.constant 20 : index
    %c0_38 = arith.constant 0 : index
    %37 = vector.load %arg8[%c20, %c0_38] : memref<24x128xf32, #tpu.memory_space<vmem>>, vector<2x128xf32>
    tpu.vector_store %arg8[%c20, %c0_38], %35 {strides = array<i32>} : memref<24x128xf32, #tpu.memory_space<vmem>>, vector<2x128xf32>,
    %c2_39 = arith.constant 2 : index
    %c0_40 = arith.constant 0 : index
    %38 = vector.load %arg8[%c2_39, %c0_40] : memref<24x128xf32, #tpu.memory_space<vmem>>, vector<18x128xf32>
    tpu.vector_store %arg8[%c2_39, %c0_40], %34 {strides = array<i32>} : memref<24x128xf32, #tpu.memory_space<vmem>>, vector<18x128xf32>,
    %c0_41 = arith.constant 0 : index
    %c0_42 = arith.constant 0 : index
    %39 = vector.load %arg8[%c0_41, %c0_42] : memref<24x128xf32, #tpu.memory_space<vmem>>, vector<18x128xf32>
    %40 = arith.truncf %39 : vector<18x128xf32> to vector<18x128xbf16>
    %c3 = arith.constant 3 : index
    %c0_43 = arith.constant 0 : index
    %c0_44 = arith.constant 0 : index
    %41 = vector.load %arg3[%c3, %c0_43, %c0_44] : memref<6x128x128xbf16, #tpu.memory_space<vmem>>, vector<1x128x128xbf16>
    %42 = vector.shape_cast %41 : vector<1x128x128xbf16> to vector<128x128xbf16>
    %cst_45 = arith.constant dense<0.000000e+00> : vector<18x128xf32>
    %43 = tpu.matmul %40, %42, %cst_45 {dimension_numbers = #tpu.dot_dimension_numbers<[1], [0], [0], [1], [0, 0, 1, 1], [], []>} : vector<18x128xbf16>, vector<128x128xbf16>, vector<18x128xf32> -> vector<18x128xf32>
    %c2_46 = arith.constant 2 : index
    %c0_47 = arith.constant 0 : index
    %44 = vector.load %arg8[%c2_46, %c0_47] : memref<24x128xf32, #tpu.memory_space<vmem>>, vector<18x128xf32>
    %45 = arith.truncf %44 : vector<18x128xf32> to vector<18x128xbf16>
    %c4 = arith.constant 4 : index
    %c0_48 = arith.constant 0 : index
    %c0_49 = arith.constant 0 : index
    %46 = vector.load %arg3[%c4, %c0_48, %c0_49] : memref<6x128x128xbf16, #tpu.memory_space<vmem>>, vector<1x128x128xbf16>
    %47 = vector.shape_cast %46 : vector<1x128x128xbf16> to vector<128x128xbf16>
    %cst_50 = arith.constant dense<0.000000e+00> : vector<18x128xf32>
    %48 = tpu.matmul %45, %47, %cst_50 {dimension_numbers = #tpu.dot_dimension_numbers<[1], [0], [0], [1], [0, 0, 1, 1], [], []>} : vector<18x128xbf16>, vector<128x128xbf16>, vector<18x128xf32> -> vector<18x128xf32>
    %49 = arith.addf %43, %48 : vector<18x128xf32>
    %c4_51 = arith.constant 4 : index
    %c0_52 = arith.constant 0 : index
    %50 = vector.load %arg8[%c4_51, %c0_52] : memref<24x128xf32, #tpu.memory_space<vmem>>, vector<18x128xf32>
    %51 = arith.truncf %50 : vector<18x128xf32> to vector<18x128xbf16>
    %c5 = arith.constant 5 : index
    %c0_53 = arith.constant 0 : index
    %c0_54 = arith.constant 0 : index
    %52 = vector.load %arg3[%c5, %c0_53, %c0_54] : memref<6x128x128xbf16, #tpu.memory_space<vmem>>, vector<1x128x128xbf16>
    %53 = vector.shape_cast %52 : vector<1x128x128xbf16> to vector<128x128xbf16>
    %cst_55 = arith.constant dense<0.000000e+00> : vector<18x128xf32>
    %54 = tpu.matmul %51, %53, %cst_55 {dimension_numbers = #tpu.dot_dimension_numbers<[1], [0], [0], [1], [0, 0, 1, 1], [], []>} : vector<18x128xbf16>, vector<128x128xbf16>, vector<18x128xf32> -> vector<18x128xf32>
    %55 = arith.addf %49, %54 : vector<18x128xf32>
    %c1_56 = arith.constant 1 : index
    %c0_57 = arith.constant 0 : index
    %c0_58 = arith.constant 0 : index
    %56 = vector.load %arg4[%c1_56, %c0_57, %c0_58] : memref<2x1x128xf32, #tpu.memory_space<vmem>>, vector<1x1x128xf32>
    %57 = vector.shape_cast %56 : vector<1x1x128xf32> to vector<1x128xf32>
    %58 = vector.broadcast %57 : vector<1x128xf32> to vector<18x128xf32>
    %59 = arith.addf %55, %58 : vector<18x128xf32>
    %60 = vector.extract_strided_slice %59 {offsets = [0, 0], sizes = [16, 128], strides = [1, 1]} : vector<18x128xf32> to vector<16x128xf32>
    %61 = arith.truncf %60 : vector<16x128xf32> to vector<16x128xbf16>
    %c0_59 = arith.constant 0 : index
    %c0_60 = arith.constant 0 : index
    %62 = vector.load %arg5[%c0_59, %c0_60] : memref<128x128xbf16, #tpu.memory_space<vmem>>, vector<128x128xbf16>
    %cst_61 = arith.constant dense<0.000000e+00> : vector<16x128xf32>
    %63 = tpu.matmul %61, %62, %cst_61 {dimension_numbers = #tpu.dot_dimension_numbers<[1], [0], [0], [1], [0, 0, 1, 1], [], []>} : vector<16x128xbf16>, vector<128x128xbf16>, vector<16x128xf32> -> vector<16x128xf32>
    %c0_62 = arith.constant 0 : index
    %c0_63 = arith.constant 0 : index
    %64 = vector.load %arg6[%c0_62, %c0_63] : memref<1x128xf32, #tpu.memory_space<vmem>>, vector<1x128xf32>
    %65 = vector.broadcast %64 : vector<1x128xf32> to vector<16x128xf32>
    %66 = arith.addf %63, %65 : vector<16x128xf32>
    %c0_64 = arith.constant 0 : index
    %c0_65 = arith.constant 0 : index
    %c0_66 = arith.constant 0 : index
    %67 = vector.load %arg7[%c0_64, %c0_65, %c0_66] : memref<1x16x128xf32, #tpu.memory_space<vmem>>, vector<1x16x128xf32>
    %68 = vector.shape_cast %67 : vector<1x16x128xf32> to vector<16x128xf32>
    %69 = vector.shape_cast %66 : vector<16x128xf32> to vector<1x16x128xf32>
    tpu.vector_store %arg7[%c0_64, %c0_65, %c0_66], %69 {strides = array<i32>} : memref<1x16x128xf32, #tpu.memory_space<vmem>>, vector<1x16x128xf32>,
    return
  }
  func.func @transform_0(%arg0: i32) -> (i32, i32, i32) {
    %c0_i32 = arith.constant 0 : i32
    %c0_i32_0 = arith.constant 0 : i32
    %c0_i32_1 = arith.constant 0 : i32
    return %arg0, %c0_i32, %c0_i32_0 : i32, i32, i32
  }
  func.func @transform_1(%arg0: i32) -> (i32, i32, i32) {
    %c0_i32 = arith.constant 0 : i32
    %c0_i32_0 = arith.constant 0 : i32
    %c0_i32_1 = arith.constant 0 : i32
    return %arg0, %c0_i32, %c0_i32_0 : i32, i32, i32
  }
  func.func @transform_2(%arg0: i32) -> (i32, i32, i32) {
    %c0_i32 = arith.constant 0 : i32
    %c0_i32_0 = arith.constant 0 : i32
    %c0_i32_1 = arith.constant 0 : i32
    %c0_i32_2 = arith.constant 0 : i32
    return %c0_i32, %c0_i32_0, %c0_i32_1 : i32, i32, i32
  }
  func.func @transform_3(%arg0: i32) -> (i32, i32, i32) {
    %c0_i32 = arith.constant 0 : i32
    %c0_i32_0 = arith.constant 0 : i32
    %c0_i32_1 = arith.constant 0 : i32
    %c0_i32_2 = arith.constant 0 : i32
    return %c0_i32, %c0_i32_0, %c0_i32_1 : i32, i32, i32
  }
  func.func @transform_4(%arg0: i32) -> (i32, i32) {
    %c0_i32 = arith.constant 0 : i32
    %c0_i32_0 = arith.constant 0 : i32
    %c0_i32_1 = arith.constant 0 : i32
    return %c0_i32, %c0_i32_0 : i32, i32
  }
  func.func @transform_5(%arg0: i32) -> (i32, i32) {
    %c0_i32 = arith.constant 0 : i32
    %c0_i32_0 = arith.constant 0 : i32
    %c0_i32_1 = arith.constant 0 : i32
    return %c0_i32, %c0_i32_0 : i32, i32
  }
  func.func @transform_6(%arg0: i32) -> (i32, i32, i32) {
    %c0_i32 = arith.constant 0 : i32
    %c0_i32_0 = arith.constant 0 : i32
    %c0_i32_1 = arith.constant 0 : i32
    return %arg0, %c0_i32, %c0_i32_0 : i32, i32, i32
  }
}

</mosaic_0001>

<llo_original>
// kernel: tpu_custom_call.1
$region0: #{tpu_custom_call.1}
  #allocation0 [shape = 'u32[]', space=smem, size = 0x4, offset = 0x4, fixed_abs, tag = 'smem constant byte address 0x4 - core index']
  #allocation1 [shape = 'u32[144,128]{1,0:T(1,128)}', space=vmem, size = 0x12000, scoped, tag = 'internal scratch']
  #allocation2 [shape = 'f32[24,128]{1,0:T(8,128)}', space=vmem, size = 0x3000, scoped, tag = 'scratch operand']
  %s0 = inlined_call_operand.hbm [shape: f32[2,16,32], index: 0, kind: input, shape index: {}]
  %s1 = inlined_call_operand.hbm [shape: f32[2,16,32], index: 1, kind: input, shape index: {}]
  %s2 = inlined_call_operand.hbm [shape: bf16[6,128,128], index: 2, kind: input, shape index: {}]
  %s3 = inlined_call_operand.vmem [shape: f32[2,1,128], index: 3, kind: input, shape index: {}]
  %s4 = inlined_call_operand.hbm [shape: bf16[128,128], index: 4, kind: input, shape index: {}]
  %s5 = inlined_call_operand.vmem [shape: f32[1,128], index: 5, kind: input, shape index: {}]
  %s6 = inlined_call_operand.hbm [shape: f32[1,16,128], index: 6, kind: output, shape index: {}]
  %s7 = sld [smem:[#allocation0]]
  $region50: #{tpu_custom_call.1} parent=0
    _
  %s9 = ssub.s32 1, %s7
  %s10 = scalar_select 0, %s9, %s7
  $region1: #{tpu_custom_call.1} parent=0
    #allocation3 [shape = 'u8[16384]{0}', space=vmem, size = 0x4000, scoped, tag = 'input window, operand 0, single buffered']
    #allocation4 [shape = 's32[1]{0}', space=sflag, size = 0x4, scoped, tag = 'scoped memory for tpu_custom_call.1']
    #allocation5 [shape = 's32[1]{0}', space=sflag, size = 0x4, scoped, tag = 'scoped memory for tpu_custom_call.1']
    #allocation6 [shape = 'u8[16384]{0}', space=vmem, size = 0x4000, scoped, tag = 'input window, operand 1, single buffered']
    #allocation7 [shape = 's32[1]{0}', space=sflag, size = 0x4, scoped, tag = 'scoped memory for tpu_custom_call.1']
    #allocation8 [shape = 'u8[196608]{0}', space=vmem, size = 0x30000, scoped, tag = 'input window, operand 2, single buffered']
    #allocation9 [shape = 'u8[32768]{0}', space=vmem, size = 0x8000, scoped, tag = 'input window, operand 4, single buffered']
    #allocation10 [shape = 's32[1]{0}', space=sflag, size = 0x4, scoped, tag = 'scoped memory for tpu_custom_call.1']
    #allocation11 [shape = 'u8[8192]{0}', space=vmem, size = 0x2000, scoped, tag = 'output window, operand 0, single buffered']
    %11 = vsyncpa [#allocation4], 0
    %12 = vsyncpa [#allocation7], 0
    %13 = vsyncpa [#allocation10], 0
    %14 = vsyncpa [#allocation5], 0
    // Predicated region
    $region2: #{tpu_custom_call.1} parent=1 // pred_check
      _
    $region3: #{tpu_custom_call.1} parent=1 // pred_check_branch
      %16 = sbr.rel (0) target = $region5
    $region4: #{tpu_custom_call.1} parent=1 // pred_region
      %s18 = ssub.s32 512, 512
      %19 = vsyncadd [#allocation4], %s18
      %s20 = sshll.u32 [#allocation3], 4
      %s21 = int_to_ptr.vmem [resolvable:$true] %s20
      %26 = dma.hbm_to_vmem [thread:$0]  %s0, 512, %s21, [#allocation4], 128, 128, 8
    $region5: #{tpu_custom_call.1} parent=1 // pred_fallthru
      _
    // Predicated region
    $region6: #{tpu_custom_call.1} parent=1 // pred_check
      _
    $region7: #{tpu_custom_call.1} parent=1 // pred_check_branch
      %28 = sbr.rel (0) target = $region9
    $region8: #{tpu_custom_call.1} parent=1 // pred_region
      %s30 = ssub.s32 512, 512
      %31 = vsyncadd [#allocation7], %s30
      %s32 = sshll.u32 [#allocation6], 4
      %s33 = int_to_ptr.vmem [resolvable:$true] %s32
      %38 = dma.hbm_to_vmem [thread:$0]  %s1, 512, %s33, [#allocation7], 128, 128, 8
    $region9: #{tpu_custom_call.1} parent=1 // pred_fallthru
      _
    // Predicated region
    $region10: #{tpu_custom_call.1} parent=1 // pred_check
      _
    $region11: #{tpu_custom_call.1} parent=1 // pred_check_branch
      %40 = sbr.rel (0) target = $region13
    $region12: #{tpu_custom_call.1} parent=1 // pred_region
      %s42 = ssub.s32 6144, 6144
      %43 = vsyncadd [#allocation7], %s42
      %s44 = sshll.u32 [#allocation8], 4
      %s45 = int_to_ptr.vmem [resolvable:$true] %s44
      %50 = dma.hbm_to_vmem [thread:$0]  %s2, 6144, %s45, [#allocation7], 64, 64, 4
    $region13: #{tpu_custom_call.1} parent=1 // pred_fallthru
      _
    // Predicated region
    $region14: #{tpu_custom_call.1} parent=1 // pred_check
      _
    $region15: #{tpu_custom_call.1} parent=1 // pred_check_branch
      %52 = sbr.rel (0) target = $region17
    $region16: #{tpu_custom_call.1} parent=1 // pred_region
      _
    $region17: #{tpu_custom_call.1} parent=1 // pred_fallthru
      _
    // Predicated region
    $region18: #{tpu_custom_call.1} parent=1 // pred_check
      _
    $region19: #{tpu_custom_call.1} parent=1 // pred_check_branch
      %54 = sbr.rel (0) target = $region21
    $region20: #{tpu_custom_call.1} parent=1 // pred_region
      %s56 = ssub.s32 1024, 1024
      %57 = vsyncadd [#allocation10], %s56
      %s58 = sshll.u32 [#allocation9], 4
      %s59 = int_to_ptr.vmem [resolvable:$true] %s58
      %64 = dma.hbm_to_vmem [thread:$0]  %s4, 1024, %s59, [#allocation10], 64, 64, 4
    $region21: #{tpu_custom_call.1} parent=1 // pred_fallthru
      _
    // Predicated region
    $region22: #{tpu_custom_call.1} parent=1 // pred_check
      _
    $region23: #{tpu_custom_call.1} parent=1 // pred_check_branch
      %66 = sbr.rel (0) target = $region25
    $region24: #{tpu_custom_call.1} parent=1 // pred_region
      _
    $region25: #{tpu_custom_call.1} parent=1 // pred_fallthru
      _
    // Predicated region
    $region26: #{tpu_custom_call.1} parent=1 // pred_check
      _
    $region27: #{tpu_custom_call.1} parent=1 // pred_check_branch
      %68 = sbr.rel (0) target = $region29
    $region28: #{tpu_custom_call.1} parent=1 // pred_region
      %69 = dma.done [#allocation4], 512
    $region29: #{tpu_custom_call.1} parent=1 // pred_fallthru
      _
    // Predicated region
    $region30: #{tpu_custom_call.1} parent=1 // pred_check
      _
    $region31: #{tpu_custom_call.1} parent=1 // pred_check_branch
      %71 = sbr.rel (0) target = $region33
    $region32: #{tpu_custom_call.1} parent=1 // pred_region
      %72 = dma.done [#allocation7], 512
    $region33: #{tpu_custom_call.1} parent=1 // pred_fallthru
      _
    // Predicated region
    $region34: #{tpu_custom_call.1} parent=1 // pred_check
      _
    $region35: #{tpu_custom_call.1} parent=1 // pred_check_branch
      %74 = sbr.rel (0) target = $region37
    $region36: #{tpu_custom_call.1} parent=1 // pred_region
      %75 = dma.done [#allocation7], 6144
    $region37: #{tpu_custom_call.1} parent=1 // pred_fallthru
      _
    // Predicated region
    $region38: #{tpu_custom_call.1} parent=1 // pred_check
      _
    $region39: #{tpu_custom_call.1} parent=1 // pred_check_branch
      %77 = sbr.rel (0) target = $region41
    $region40: #{tpu_custom_call.1} parent=1 // pred_region
      %78 = dma.done [#allocation10], 1024
    $region41: #{tpu_custom_call.1} parent=1 // pred_fallthru
      _
    %80 = vst [vmem:[#allocation2] sm:$0xff] 0.0
    %81 = vst [vmem:[#allocation2 + $0x8] sm:$0xff] 0.0
    %82 = vst [vmem:[#allocation2 + $0x10] sm:$0xff] 0.0
    %v83 = vld [vmem:[#allocation3] sm:$0xff]
    %v84 = vld [vmem:[#allocation3 + $0x8] sm:$0xff]
    %v85 = vld [vmem:[#allocation6] sm:$0xff]
    %v86 = vld [vmem:[#allocation6 + $0x8] sm:$0xff]
    %v87 = vadd.f32 %v83, %v85
    %v88 = vadd.f32 %v84, %v86
    %vm89 = vcmask 261120
    %90 = vst.msk [vmem:[#allocation2 + $0x2] sm:$0xff] %vm89, %v87
    %91 = vst.msk [vmem:[#allocation2 + $0xa] sm:$0xff] %vm89, %v88
    %s92 = scalar_lea.vmem [#allocation3], 16
    %v93 = vld [vmem:[%s92] sm:$0xff]
    %v94 = vld [vmem:[%s92 + $0x8] sm:$0xff]
    %s95 = scalar_lea.vmem [#allocation6], 16
    %v96 = vld [vmem:[%s95] sm:$0xff]
    %v97 = vld [vmem:[%s95 + $0x8] sm:$0xff]
    %v98 = vadd.f32 %v93, %v96
    %v99 = vadd.f32 %v94, %v97
    %102 = vrot.lane.b32.xlu0 %v98, 32
    %v103 = vpop.permute.xlu0 %102
    %104 = vrot.lane.b32.xlu0 %v99, 32
    %v105 = vpop.permute.xlu0 %104
    %vm108 = vcmask 523520
    %109 = vst.msk [vmem:[#allocation2 + $0x2] sm:$0xff] %vm108, %v103
    %110 = vst.msk [vmem:[#allocation2 + $0xa] sm:$0xff] %vm108, %v105
    %v111 = vld [vmem:[#allocation2] sm:$0xff]
    %v112 = vld [vmem:[#allocation2 + $0x8] sm:$0xff]
    %v113 = vld [vmem:[#allocation2 + $0x10] sm:$0x3]
    %v114 = vpack.c.bf16 %v112, %v111
    %v115 = vpack.c.bf16 %v113, %v113
    %v116 = vld [vmem:[#allocation8] sm:$0xf]
    %v117 = vld [vmem:[#allocation8 + $0x4] sm:$0xf]
    %v118 = vld [vmem:[#allocation8 + $0x8] sm:$0xf]
    %v119 = vld [vmem:[#allocation8 + $0xc] sm:$0xf]
    %v120 = vld [vmem:[#allocation8 + $0x10] sm:$0xf]
    %v121 = vld [vmem:[#allocation8 + $0x14] sm:$0xf]
    %v122 = vld [vmem:[#allocation8 + $0x18] sm:$0xf]
    %v123 = vld [vmem:[#allocation8 + $0x1c] sm:$0xf]
    %v124 = vld [vmem:[#allocation8 + $0x20] sm:$0xf]
    %v125 = vld [vmem:[#allocation8 + $0x24] sm:$0xf]
    %v126 = vld [vmem:[#allocation8 + $0x28] sm:$0xf]
    %v127 = vld [vmem:[#allocation8 + $0x2c] sm:$0xf]
    %v128 = vld [vmem:[#allocation8 + $0x30] sm:$0xf]
    %v129 = vld [vmem:[#allocation8 + $0x34] sm:$0xf]
    %v130 = vld [vmem:[#allocation8 + $0x38] sm:$0xf]
    %v131 = vld [vmem:[#allocation8 + $0x3c] sm:$0xf]
    %v132 = vld [vmem:[#allocation2 + $0x1] sm:$0xff]
    %v133 = vld [vmem:[#allocation2 + $0x9] sm:$0xff]
    %v134 = vld [vmem:[#allocation2 + $0x11] sm:$0x3]
    %v135 = vpack.c.bf16 %v133, %v132
    %v136 = vpack.c.bf16 %v134, %v134
    %s137 = scalar_lea.vmem [#allocation8], 64
    %v138 = vld [vmem:[%s137] sm:$0xf]
    %v139 = vld [vmem:[%s137 + $0x4] sm:$0xf]
    %v140 = vld [vmem:[%s137 + $0x8] sm:$0xf]
    %v141 = vld [vmem:[%s137 + $0xc] sm:$0xf]
    %v142 = vld [vmem:[%s137 + $0x10] sm:$0xf]
    %v143 = vld [vmem:[%s137 + $0x14] sm:$0xf]
    %v144 = vld [vmem:[%s137 + $0x18] sm:$0xf]
    %v145 = vld [vmem:[%s137 + $0x1c] sm:$0xf]
    %v146 = vld [vmem:[%s137 + $0x20] sm:$0xf]
    %v147 = vld [vmem:[%s137 + $0x24] sm:$0xf]
    %v148 = vld [vmem:[%s137 + $0x28] sm:$0xf]
    %v149 = vld [vmem:[%s137 + $0x2c] sm:$0xf]
    %v150 = vld [vmem:[%s137 + $0x30] sm:$0xf]
    %v151 = vld [vmem:[%s137 + $0x34] sm:$0xf]
    %v152 = vld [vmem:[%s137 + $0x38] sm:$0xf]
    %v153 = vld [vmem:[%s137 + $0x3c] sm:$0xf]
    %v170 = vunpack.c.l.b16 %v138
    %v171 = vunpack.c.l.b16 %v139
    %v172 = vunpack.c.l.b16 %v140
    %v173 = vunpack.c.l.b16 %v141
    %v174 = vunpack.c.l.b16 %v142
    %v175 = vunpack.c.l.b16 %v143
    %v176 = vunpack.c.l.b16 %v144
    %v177 = vunpack.c.l.b16 %v145
    %v178 = vunpack.c.l.b16 %v146
    %v179 = vunpack.c.l.b16 %v147
    %v180 = vunpack.c.l.b16 %v148
    %v181 = vunpack.c.l.b16 %v149
    %v182 = vunpack.c.l.b16 %v150
    %v183 = vunpack.c.l.b16 %v151
    %v184 = vunpack.c.l.b16 %v152
    %v185 = vunpack.c.l.b16 %v153
    %v186 = vpack.c.b16 %v171, %v170
    %v187 = vpack.c.b16 %v173, %v172
    %v188 = vpack.c.b16 %v175, %v174
    %v189 = vpack.c.b16 %v177, %v176
    %v190 = vpack.c.b16 %v179, %v178
    %v191 = vpack.c.b16 %v181, %v180
    %v192 = vpack.c.b16 %v183, %v182
    %v193 = vpack.c.b16 %v185, %v184
    %202 = vmatprep.subr.bf16.mxu0 0
    %203 = vmatpush1.bf16.msra.mxu0 %v193
    %204 = vmatprep.subr.bf16.mxu0 0
    %205 = vmatpush1.bf16.msra.mxu0 %v192
    %206 = vmatprep.subr.bf16.mxu0 0
    %207 = vmatpush1.bf16.msra.mxu0 %v191
    %208 = vmatprep.subr.bf16.mxu0 0
    %209 = vmatpush1.bf16.msra.mxu0 %v190
    %210 = vmatprep.subr.bf16.mxu0 0
    %211 = vmatpush1.bf16.msra.mxu0 %v189
    %212 = vmatprep.subr.bf16.mxu0 0
    %213 = vmatpush1.bf16.msra.mxu0 %v188
    %214 = vmatprep.subr.bf16.mxu0 0
    %215 = vmatpush1.bf16.msra.mxu0 %v187
    %216 = vmatprep.subr.bf16.mxu0 0
    %217 = vmatpush1.bf16.msra.mxu0 %v186
    %218 = vmatprep.subr.bf16.mxu0 0
    %219 = vmatpush2.bf16.msra.mxu0 0
    %220 = vmatprep.subr.bf16.mxu0 0
    %221 = vmatpush2.bf16.msra.mxu0 0
    %222 = vmatprep.subr.bf16.mxu0 0
    %223 = vmatpush2.bf16.msra.mxu0 0
    %224 = vmatprep.subr.bf16.mxu0 0
    %225 = vmatpush2.bf16.msra.mxu0 0
    %226 = vmatprep.subr.bf16.mxu0 0
    %227 = vmatpush2.bf16.msra.mxu0 0
    %228 = vmatprep.subr.bf16.mxu0 0
    %229 = vmatpush2.bf16.msra.mxu0 0
    %230 = vmatprep.subr.bf16.mxu0 0
    %231 = vmatpush2.bf16.msra.mxu0 0
    %232 = vmatprep.subr.bf16.mxu0 0
    %233 = vmatpush2.bf16.msra.mxu0 0
    %234 = vmatprep.mubr.bf16.mxu0 0
    %235 = vmatmul.mubr.bf16.gmra.mxu0 %v135
    %v236 = vpop.f32.mrf.mxu0
    %v237 = vadd.f32 0.0, %v236
    %v238 = vpop.f32.mrf.mxu0
    %v239 = vpop.f32.mrf.mxu0
    %v240 = vadd.f32 0.0, %v239
    %v241 = vpop.f32.mrf.mxu0
    %242 = vmatprep.mubr.bf16.mxu0 0
    %243 = vmatmul.mubr.bf16.gmra.mxu0 %v136
    %v244 = vpop.f32.mrf.mxu0
    %v245 = vadd.f32 0.0, %v244
    %v246 = vpop.f32.mrf.mxu0
    %v247 = vpop.f32.mrf.mxu0
    %v248 = vpop.f32.mrf.mxu0
    %249 = vdwg.mxu0
    %v266 = vunpack.c.l.b16 %v116
    %v267 = vunpack.c.l.b16 %v117
    %v268 = vunpack.c.l.b16 %v118
    %v269 = vunpack.c.l.b16 %v119
    %v270 = vunpack.c.l.b16 %v120
    %v271 = vunpack.c.l.b16 %v121
    %v272 = vunpack.c.l.b16 %v122
    %v273 = vunpack.c.l.b16 %v123
    %v274 = vunpack.c.l.b16 %v124
    %v275 = vunpack.c.l.b16 %v125
    %v276 = vunpack.c.l.b16 %v126
    %v277 = vunpack.c.l.b16 %v127
    %v278 = vunpack.c.l.b16 %v128
    %v279 = vunpack.c.l.b16 %v129
    %v280 = vunpack.c.l.b16 %v130
    %v281 = vunpack.c.l.b16 %v131
    %v282 = vpack.c.b16 %v267, %v266
    %v283 = vpack.c.b16 %v269, %v268
    %v284 = vpack.c.b16 %v271, %v270
    %v285 = vpack.c.b16 %v273, %v272
    %v286 = vpack.c.b16 %v275, %v274
    %v287 = vpack.c.b16 %v277, %v276
    %v288 = vpack.c.b16 %v279, %v278
    %v289 = vpack.c.b16 %v281, %v280
    %298 = vmatprep.subr.bf16.mxu0 0
    %299 = vmatpush1.bf16.msra.mxu0 %v289
    %300 = vmatprep.subr.bf16.mxu0 0
    %301 = vmatpush1.bf16.msra.mxu0 %v288
    %302 = vmatprep.subr.bf16.mxu0 0
    %303 = vmatpush1.bf16.msra.mxu0 %v287
    %304 = vmatprep.subr.bf16.mxu0 0
    %305 = vmatpush1.bf16.msra.mxu0 %v286
    %306 = vmatprep.subr.bf16.mxu0 0
    %307 = vmatpush1.bf16.msra.mxu0 %v285
    %308 = vmatprep.subr.bf16.mxu0 0
    %309 = vmatpush1.bf16.msra.mxu0 %v284
    %310 = vmatprep.subr.bf16.mxu0 0
    %311 = vmatpush1.bf16.msra.mxu0 %v283
    %312 = vmatprep.subr.bf16.mxu0 0
    %313 = vmatpush1.bf16.msra.mxu0 %v282
    %314 = vmatprep.subr.bf16.mxu0 0
    %315 = vmatpush2.bf16.msra.mxu0 0
    %316 = vmatprep.subr.bf16.mxu0 0
    %317 = vmatpush2.bf16.msra.mxu0 0
    %318 = vmatprep.subr.bf16.mxu0 0
    %319 = vmatpush2.bf16.msra.mxu0 0
    %320 = vmatprep.subr.bf16.mxu0 0
    %321 = vmatpush2.bf16.msra.mxu0 0
    %322 = vmatprep.subr.bf16.mxu0 0
    %323 = vmatpush2.bf16.msra.mxu0 0
    %324 = vmatprep.subr.bf16.mxu0 0
    %325 = vmatpush2.bf16.msra.mxu0 0
    %326 = vmatprep.subr.bf16.mxu0 0
    %327 = vmatpush2.bf16.msra.mxu0 0
    %328 = vmatprep.subr.bf16.mxu0 0
    %329 = vmatpush2.bf16.msra.mxu0 0
    %330 = vmatprep.mubr.bf16.mxu0 0
    %331 = vmatmul.mubr.bf16.gmra.mxu0 %v114
    %v332 = vpop.f32.mrf.mxu0
    %v333 = vadd.f32 %v237, %v332
    %v334 = vpop.f32.mrf.mxu0
    %v335 = vpop.f32.mrf.mxu0
    %v336 = vadd.f32 %v240, %v335
    %v337 = vpop.f32.mrf.mxu0
    %338 = vmatprep.mubr.bf16.mxu0 0
    %339 = vmatmul.mubr.bf16.gmra.mxu0 %v115
    %v340 = vpop.f32.mrf.mxu0
    %v341 = vadd.f32 %v245, %v340
    %v342 = vpop.f32.mrf.mxu0
    %v343 = vpop.f32.mrf.mxu0
    %v344 = vpop.f32.mrf.mxu0
    %345 = vdwg.mxu0
    %v346 = vld [vmem:[#allocation2 + $0x2] sm:$0xff]
    %v347 = vld [vmem:[#allocation2 + $0xa] sm:$0xff]
    %v348 = vld [vmem:[#allocation2 + $0x12] sm:$0x3]
    %v349 = vpack.c.bf16 %v347, %v346
    %v350 = vpack.c.bf16 %v348, %v348
    %s351 = scalar_lea.vmem [#allocation8], 128
    %v352 = vld [vmem:[%s351] sm:$0xf]
    %v353 = vld [vmem:[%s351 + $0x4] sm:$0xf]
    %v354 = vld [vmem:[%s351 + $0x8] sm:$0xf]
    %v355 = vld [vmem:[%s351 + $0xc] sm:$0xf]
    %v356 = vld [vmem:[%s351 + $0x10] sm:$0xf]
    %v357 = vld [vmem:[%s351 + $0x14] sm:$0xf]
    %v358 = vld [vmem:[%s351 + $0x18] sm:$0xf]
    %v359 = vld [vmem:[%s351 + $0x1c] sm:$0xf]
    %v360 = vld [vmem:[%s351 + $0x20] sm:$0xf]
    %v361 = vld [vmem:[%s351 + $0x24] sm:$0xf]
    %v362 = vld [vmem:[%s351 + $0x28] sm:$0xf]
    %v363 = vld [vmem:[%s351 + $0x2c] sm:$0xf]
    %v364 = vld [vmem:[%s351 + $0x30] sm:$0xf]
    %v365 = vld [vmem:[%s351 + $0x34] sm:$0xf]
    %v366 = vld [vmem:[%s351 + $0x38] sm:$0xf]
    %v367 = vld [vmem:[%s351 + $0x3c] sm:$0xf]
    %v384 = vunpack.c.l.b16 %v352
    %v385 = vunpack.c.l.b16 %v353
    %v386 = vunpack.c.l.b16 %v354
    %v387 = vunpack.c.l.b16 %v355
    %v388 = vunpack.c.l.b16 %v356
    %v389 = vunpack.c.l.b16 %v357
    %v390 = vunpack.c.l.b16 %v358
    %v391 = vunpack.c.l.b16 %v359
    %v392 = vunpack.c.l.b16 %v360
    %v393 = vunpack.c.l.b16 %v361
    %v394 = vunpack.c.l.b16 %v362
    %v395 = vunpack.c.l.b16 %v363
    %v396 = vunpack.c.l.b16 %v364
    %v397 = vunpack.c.l.b16 %v365
    %v398 = vunpack.c.l.b16 %v366
    %v399 = vunpack.c.l.b16 %v367
    %v400 = vpack.c.b16 %v385, %v384
    %v401 = vpack.c.b16 %v387, %v386
    %v402 = vpack.c.b16 %v389, %v388
    %v403 = vpack.c.b16 %v391, %v390
    %v404 = vpack.c.b16 %v393, %v392
    %v405 = vpack.c.b16 %v395, %v394
    %v406 = vpack.c.b16 %v397, %v396
    %v407 = vpack.c.b16 %v399, %v398
    %416 = vmatprep.subr.bf16.mxu0 0
    %417 = vmatpush1.bf16.msra.mxu0 %v407
    %418 = vmatprep.subr.bf16.mxu0 0
    %419 = vmatpush1.bf16.msra.mxu0 %v406
    %420 = vmatprep.subr.bf16.mxu0 0
    %421 = vmatpush1.bf16.msra.mxu0 %v405
    %422 = vmatprep.subr.bf16.mxu0 0
    %423 = vmatpush1.bf16.msra.mxu0 %v404
    %424 = vmatprep.subr.bf16.mxu0 0
    %425 = vmatpush1.bf16.msra.mxu0 %v403
    %426 = vmatprep.subr.bf16.mxu0 0
    %427 = vmatpush1.bf16.msra.mxu0 %v402
    %428 = vmatprep.subr.bf16.mxu0 0
    %429 = vmatpush1.bf16.msra.mxu0 %v401
    %430 = vmatprep.subr.bf16.mxu0 0
    %431 = vmatpush1.bf16.msra.mxu0 %v400
    %432 = vmatprep.subr.bf16.mxu0 0
    %433 = vmatpush2.bf16.msra.mxu0 0
    %434 = vmatprep.subr.bf16.mxu0 0
    %435 = vmatpush2.bf16.msra.mxu0 0
    %436 = vmatprep.subr.bf16.mxu0 0
    %437 = vmatpush2.bf16.msra.mxu0 0
    %438 = vmatprep.subr.bf16.mxu0 0
    %439 = vmatpush2.bf16.msra.mxu0 0
    %440 = vmatprep.subr.bf16.mxu0 0
    %441 = vmatpush2.bf16.msra.mxu0 0
    %442 = vmatprep.subr.bf16.mxu0 0
    %443 = vmatpush2.bf16.msra.mxu0 0
    %444 = vmatprep.subr.bf16.mxu0 0
    %445 = vmatpush2.bf16.msra.mxu0 0
    %446 = vmatprep.subr.bf16.mxu0 0
    %447 = vmatpush2.bf16.msra.mxu0 0
    %448 = vmatprep.mubr.bf16.mxu0 0
    %449 = vmatmul.mubr.bf16.gmra.mxu0 %v349
    %v450 = vpop.f32.mrf.mxu0
    %v451 = vadd.f32 0.0, %v450
    %v452 = vpop.f32.mrf.mxu0
    %v453 = vpop.f32.mrf.mxu0
    %v454 = vadd.f32 0.0, %v453
    %v455 = vpop.f32.mrf.mxu0
    %456 = vmatprep.mubr.bf16.mxu0 0
    %457 = vmatmul.mubr.bf16.gmra.mxu0 %v350
    %v458 = vpop.f32.mrf.mxu0
    %v459 = vadd.f32 0.0, %v458
    %v460 = vpop.f32.mrf.mxu0
    %v461 = vpop.f32.mrf.mxu0
    %v462 = vpop.f32.mrf.mxu0
    %463 = vdwg.mxu0
    %v464 = vadd.f32 %v333, %v451
    %v465 = vadd.f32 %v336, %v454
    %v466 = vadd.f32 %v341, %v459
    %v467 = vld [vmem:[%s3] sm:$0x1]
    %v469 = vlaneseq
    %v470 = vshrl.u32 %v469, 7
    %v471 = vsub.s32 0, %v470
    %v472 = vrot.slane %v467, %v471
    %v474 = vadd.f32 %v464, %v472
    %v475 = vadd.f32 %v465, %v472
    %v476 = vadd.f32 %v466, %v472
    %477 = vst [vmem:[#allocation2] sm:$0x3] 0.0
    %478 = vst [vmem:[#allocation2 + $0x14] sm:$0x3] 0.0
    %479 = vst [vmem:[#allocation2 + $0x2] sm:$0xff] %v474
    %480 = vst [vmem:[#allocation2 + $0xa] sm:$0xff] %v475
    %481 = vst [vmem:[#allocation2 + $0x12] sm:$0x3] %v476
    %v482 = vld [vmem:[#allocation2] sm:$0xff]
    %v483 = vld [vmem:[#allocation2 + $0x8] sm:$0xff]
    %v484 = vld [vmem:[#allocation2 + $0x10] sm:$0x3]
    %v485 = vpack.c.bf16 %v483, %v482
    %v486 = vpack.c.bf16 %v484, %v484
    %s487 = scalar_lea.vmem [#allocation8], 192
    %v488 = vld [vmem:[%s487] sm:$0xf]
    %v489 = vld [vmem:[%s487 + $0x4] sm:$0xf]
    %v490 = vld [vmem:[%s487 + $0x8] sm:$0xf]
    %v491 = vld [vmem:[%s487 + $0xc] sm:$0xf]
    %v492 = vld [vmem:[%s487 + $0x10] sm:$0xf]
    %v493 = vld [vmem:[%s487 + $0x14] sm:$0xf]
    %v494 = vld [vmem:[%s487 + $0x18] sm:$0xf]
    %v495 = vld [vmem:[%s487 + $0x1c] sm:$0xf]
    %v496 = vld [vmem:[%s487 + $0x20] sm:$0xf]
    %v497 = vld [vmem:[%s487 + $0x24] sm:$0xf]
    %v498 = vld [vmem:[%s487 + $0x28] sm:$0xf]
    %v499 = vld [vmem:[%s487 + $0x2c] sm:$0xf]
    %v500 = vld [vmem:[%s487 + $0x30] sm:$0xf]
    %v501 = vld [vmem:[%s487 + $0x34] sm:$0xf]
    %v502 = vld [vmem:[%s487 + $0x38] sm:$0xf]
    %v503 = vld [vmem:[%s487 + $0x3c] sm:$0xf]
    %v504 = vld [vmem:[#allocation2 + $0x2] sm:$0xff]
    %v505 = vld [vmem:[#allocation2 + $0xa] sm:$0xff]
    %v506 = vld [vmem:[#allocation2 + $0x12] sm:$0x3]
    %v507 = vpack.c.bf16 %v505, %v504
    %v508 = vpack.c.bf16 %v506, %v506
    %s509 = scalar_lea.vmem [#allocation8], 256
    %v510 = vld [vmem:[%s509] sm:$0xf]
    %v511 = vld [vmem:[%s509 + $0x4] sm:$0xf]
    %v512 = vld [vmem:[%s509 + $0x8] sm:$0xf]
    %v513 = vld [vmem:[%s509 + $0xc] sm:$0xf]
    %v514 = vld [vmem:[%s509 + $0x10] sm:$0xf]
    %v515 = vld [vmem:[%s509 + $0x14] sm:$0xf]
    %v516 = vld [vmem:[%s509 + $0x18] sm:$0xf]
    %v517 = vld [vmem:[%s509 + $0x1c] sm:$0xf]
    %v518 = vld [vmem:[%s509 + $0x20] sm:$0xf]
    %v519 = vld [vmem:[%s509 + $0x24] sm:$0xf]
    %v520 = vld [vmem:[%s509 + $0x28] sm:$0xf]
    %v521 = vld [vmem:[%s509 + $0x2c] sm:$0xf]
    %v522 = vld [vmem:[%s509 + $0x30] sm:$0xf]
    %v523 = vld [vmem:[%s509 + $0x34] sm:$0xf]
    %v524 = vld [vmem:[%s509 + $0x38] sm:$0xf]
    %v525 = vld [vmem:[%s509 + $0x3c] sm:$0xf]
    %v542 = vunpack.c.l.b16 %v510
    %v543 = vunpack.c.l.b16 %v511
    %v544 = vunpack.c.l.b16 %v512
    %v545 = vunpack.c.l.b16 %v513
    %v546 = vunpack.c.l.b16 %v514
    %v547 = vunpack.c.l.b16 %v515
    %v548 = vunpack.c.l.b16 %v516
    %v549 = vunpack.c.l.b16 %v517
    %v550 = vunpack.c.l.b16 %v518
    %v551 = vunpack.c.l.b16 %v519
    %v552 = vunpack.c.l.b16 %v520
    %v553 = vunpack.c.l.b16 %v521
    %v554 = vunpack.c.l.b16 %v522
    %v555 = vunpack.c.l.b16 %v523
    %v556 = vunpack.c.l.b16 %v524
    %v557 = vunpack.c.l.b16 %v525
    %v558 = vpack.c.b16 %v543, %v542
    %v559 = vpack.c.b16 %v545, %v544
    %v560 = vpack.c.b16 %v547, %v546
    %v561 = vpack.c.b16 %v549, %v548
    %v562 = vpack.c.b16 %v551, %v550
    %v563 = vpack.c.b16 %v553, %v552
    %v564 = vpack.c.b16 %v555, %v554
    %v565 = vpack.c.b16 %v557, %v556
    %574 = vmatprep.subr.bf16.mxu0 0
    %575 = vmatpush1.bf16.msra.mxu0 %v565
    %576 = vmatprep.subr.bf16.mxu0 0
    %577 = vmatpush1.bf16.msra.mxu0 %v564
    %578 = vmatprep.subr.bf16.mxu0 0
    %579 = vmatpush1.bf16.msra.mxu0 %v563
    %580 = vmatprep.subr.bf16.mxu0 0
    %581 = vmatpush1.bf16.msra.mxu0 %v562
    %582 = vmatprep.subr.bf16.mxu0 0
    %583 = vmatpush1.bf16.msra.mxu0 %v561
    %584 = vmatprep.subr.bf16.mxu0 0
    %585 = vmatpush1.bf16.msra.mxu0 %v560
    %586 = vmatprep.subr.bf16.mxu0 0
    %587 = vmatpush1.bf16.msra.mxu0 %v559
    %588 = vmatprep.subr.bf16.mxu0 0
    %589 = vmatpush1.bf16.msra.mxu0 %v558
    %590 = vmatprep.subr.bf16.mxu0 0
    %591 = vmatpush2.bf16.msra.mxu0 0
    %592 = vmatprep.subr.bf16.mxu0 0
    %593 = vmatpush2.bf16.msra.mxu0 0
    %594 = vmatprep.subr.bf16.mxu0 0
    %595 = vmatpush2.bf16.msra.mxu0 0
    %596 = vmatprep.subr.bf16.mxu0 0
    %597 = vmatpush2.bf16.msra.mxu0 0
    %598 = vmatprep.subr.bf16.mxu0 0
    %599 = vmatpush2.bf16.msra.mxu0 0
    %600 = vmatprep.subr.bf16.mxu0 0
    %601 = vmatpush2.bf16.msra.mxu0 0
    %602 = vmatprep.subr.bf16.mxu0 0
    %603 = vmatpush2.bf16.msra.mxu0 0
    %604 = vmatprep.subr.bf16.mxu0 0
    %605 = vmatpush2.bf16.msra.mxu0 0
    %606 = vmatprep.mubr.bf16.mxu0 0
    %607 = vmatmul.mubr.bf16.gmra.mxu0 %v507
    %v608 = vpop.f32.mrf.mxu0
    %v609 = vadd.f32 0.0, %v608
    %v610 = vpop.f32.mrf.mxu0
    %v611 = vpop.f32.mrf.mxu0
    %v612 = vadd.f32 0.0, %v611
    %v613 = vpop.f32.mrf.mxu0
    %614 = vmatprep.mubr.bf16.mxu0 0
    %615 = vmatmul.mubr.bf16.gmra.mxu0 %v508
    %v616 = vpop.f32.mrf.mxu0
    %v617 = vpop.f32.mrf.mxu0
    %v618 = vpop.f32.mrf.mxu0
    %v619 = vpop.f32.mrf.mxu0
    %620 = vdwg.mxu0
    %v637 = vunpack.c.l.b16 %v488
    %v638 = vunpack.c.l.b16 %v489
    %v639 = vunpack.c.l.b16 %v490
    %v640 = vunpack.c.l.b16 %v491
    %v641 = vunpack.c.l.b16 %v492
    %v642 = vunpack.c.l.b16 %v493
    %v643 = vunpack.c.l.b16 %v494
    %v644 = vunpack.c.l.b16 %v495
    %v645 = vunpack.c.l.b16 %v496
    %v646 = vunpack.c.l.b16 %v497
    %v647 = vunpack.c.l.b16 %v498
    %v648 = vunpack.c.l.b16 %v499
    %v649 = vunpack.c.l.b16 %v500
    %v650 = vunpack.c.l.b16 %v501
    %v651 = vunpack.c.l.b16 %v502
    %v652 = vunpack.c.l.b16 %v503
    %v653 = vpack.c.b16 %v638, %v637
    %v654 = vpack.c.b16 %v640, %v639
    %v655 = vpack.c.b16 %v642, %v641
    %v656 = vpack.c.b16 %v644, %v643
    %v657 = vpack.c.b16 %v646, %v645
    %v658 = vpack.c.b16 %v648, %v647
    %v659 = vpack.c.b16 %v650, %v649
    %v660 = vpack.c.b16 %v652, %v651
    %669 = vmatprep.subr.bf16.mxu0 0
    %670 = vmatpush1.bf16.msra.mxu0 %v660
    %671 = vmatprep.subr.bf16.mxu0 0
    %672 = vmatpush1.bf16.msra.mxu0 %v659
    %673 = vmatprep.subr.bf16.mxu0 0
    %674 = vmatpush1.bf16.msra.mxu0 %v658
    %675 = vmatprep.subr.bf16.mxu0 0
    %676 = vmatpush1.bf16.msra.mxu0 %v657
    %677 = vmatprep.subr.bf16.mxu0 0
    %678 = vmatpush1.bf16.msra.mxu0 %v656
    %679 = vmatprep.subr.bf16.mxu0 0
    %680 = vmatpush1.bf16.msra.mxu0 %v655
    %681 = vmatprep.subr.bf16.mxu0 0
    %682 = vmatpush1.bf16.msra.mxu0 %v654
    %683 = vmatprep.subr.bf16.mxu0 0
    %684 = vmatpush1.bf16.msra.mxu0 %v653
    %685 = vmatprep.subr.bf16.mxu0 0
    %686 = vmatpush2.bf16.msra.mxu0 0
    %687 = vmatprep.subr.bf16.mxu0 0
    %688 = vmatpush2.bf16.msra.mxu0 0
    %689 = vmatprep.subr.bf16.mxu0 0
    %690 = vmatpush2.bf16.msra.mxu0 0
    %691 = vmatprep.subr.bf16.mxu0 0
    %692 = vmatpush2.bf16.msra.mxu0 0
    %693 = vmatprep.subr.bf16.mxu0 0
    %694 = vmatpush2.bf16.msra.mxu0 0
    %695 = vmatprep.subr.bf16.mxu0 0
    %696 = vmatpush2.bf16.msra.mxu0 0
    %697 = vmatprep.subr.bf16.mxu0 0
    %698 = vmatpush2.bf16.msra.mxu0 0
    %699 = vmatprep.subr.bf16.mxu0 0
    %700 = vmatpush2.bf16.msra.mxu0 0
    %701 = vmatprep.mubr.bf16.mxu0 0
    %702 = vmatmul.mubr.bf16.gmra.mxu0 %v485
    %v703 = vpop.f32.mrf.mxu0
    %v704 = vadd.f32 %v609, %v703
    %v705 = vpop.f32.mrf.mxu0
    %v706 = vpop.f32.mrf.mxu0
    %v707 = vadd.f32 %v612, %v706
    %v708 = vpop.f32.mrf.mxu0
    %709 = vmatprep.mubr.bf16.mxu0 0
    %710 = vmatmul.mubr.bf16.gmra.mxu0 %v486
    %v711 = vpop.f32.mrf.mxu0
    %v712 = vpop.f32.mrf.mxu0
    %v713 = vpop.f32.mrf.mxu0
    %v714 = vpop.f32.mrf.mxu0
    %715 = vdwg.mxu0
    %v716 = vld [vmem:[#allocation2 + $0x4] sm:$0xff]
    %v717 = vld [vmem:[#allocation2 + $0xc] sm:$0xff]
    %v718 = vld [vmem:[#allocation2 + $0x14] sm:$0x3]
    %v719 = vpack.c.bf16 %v717, %v716
    %v720 = vpack.c.bf16 %v718, %v718
    %s721 = scalar_lea.vmem [#allocation8], 320
    %v722 = vld [vmem:[%s721] sm:$0xf]
    %v723 = vld [vmem:[%s721 + $0x4] sm:$0xf]
    %v724 = vld [vmem:[%s721 + $0x8] sm:$0xf]
    %v725 = vld [vmem:[%s721 + $0xc] sm:$0xf]
    %v726 = vld [vmem:[%s721 + $0x10] sm:$0xf]
    %v727 = vld [vmem:[%s721 + $0x14] sm:$0xf]
    %v728 = vld [vmem:[%s721 + $0x18] sm:$0xf]
    %v729 = vld [vmem:[%s721 + $0x1c] sm:$0xf]
    %v730 = vld [vmem:[%s721 + $0x20] sm:$0xf]
    %v731 = vld [vmem:[%s721 + $0x24] sm:$0xf]
    %v732 = vld [vmem:[%s721 + $0x28] sm:$0xf]
    %v733 = vld [vmem:[%s721 + $0x2c] sm:$0xf]
    %v734 = vld [vmem:[%s721 + $0x30] sm:$0xf]
    %v735 = vld [vmem:[%s721 + $0x34] sm:$0xf]
    %v736 = vld [vmem:[%s721 + $0x38] sm:$0xf]
    %v737 = vld [vmem:[%s721 + $0x3c] sm:$0xf]
    %v754 = vunpack.c.l.b16 %v722
    %v755 = vunpack.c.l.b16 %v723
    %v756 = vunpack.c.l.b16 %v724
    %v757 = vunpack.c.l.b16 %v725
    %v758 = vunpack.c.l.b16 %v726
    %v759 = vunpack.c.l.b16 %v727
    %v760 = vunpack.c.l.b16 %v728
    %v761 = vunpack.c.l.b16 %v729
    %v762 = vunpack.c.l.b16 %v730
    %v763 = vunpack.c.l.b16 %v731
    %v764 = vunpack.c.l.b16 %v732
    %v765 = vunpack.c.l.b16 %v733
    %v766 = vunpack.c.l.b16 %v734
    %v767 = vunpack.c.l.b16 %v735
    %v768 = vunpack.c.l.b16 %v736
    %v769 = vunpack.c.l.b16 %v737
    %v770 = vpack.c.b16 %v755, %v754
    %v771 = vpack.c.b16 %v757, %v756
    %v772 = vpack.c.b16 %v759, %v758
    %v773 = vpack.c.b16 %v761, %v760
    %v774 = vpack.c.b16 %v763, %v762
    %v775 = vpack.c.b16 %v765, %v764
    %v776 = vpack.c.b16 %v767, %v766
    %v777 = vpack.c.b16 %v769, %v768
    %786 = vmatprep.subr.bf16.mxu0 0
    %787 = vmatpush1.bf16.msra.mxu0 %v777
    %788 = vmatprep.subr.bf16.mxu0 0
    %789 = vmatpush1.bf16.msra.mxu0 %v776
    %790 = vmatprep.subr.bf16.mxu0 0
    %791 = vmatpush1.bf16.msra.mxu0 %v775
    %792 = vmatprep.subr.bf16.mxu0 0
    %793 = vmatpush1.bf16.msra.mxu0 %v774
    %794 = vmatprep.subr.bf16.mxu0 0
    %795 = vmatpush1.bf16.msra.mxu0 %v773
    %796 = vmatprep.subr.bf16.mxu0 0
    %797 = vmatpush1.bf16.msra.mxu0 %v772
    %798 = vmatprep.subr.bf16.mxu0 0
    %799 = vmatpush1.bf16.msra.mxu0 %v771
    %800 = vmatprep.subr.bf16.mxu0 0
    %801 = vmatpush1.bf16.msra.mxu0 %v770
    %802 = vmatprep.subr.bf16.mxu0 0
    %803 = vmatpush2.bf16.msra.mxu0 0
    %804 = vmatprep.subr.bf16.mxu0 0
    %805 = vmatpush2.bf16.msra.mxu0 0
    %806 = vmatprep.subr.bf16.mxu0 0
    %807 = vmatpush2.bf16.msra.mxu0 0
    %808 = vmatprep.subr.bf16.mxu0 0
    %809 = vmatpush2.bf16.msra.mxu0 0
    %810 = vmatprep.subr.bf16.mxu0 0
    %811 = vmatpush2.bf16.msra.mxu0 0
    %812 = vmatprep.subr.bf16.mxu0 0
    %813 = vmatpush2.bf16.msra.mxu0 0
    %814 = vmatprep.subr.bf16.mxu0 0
    %815 = vmatpush2.bf16.msra.mxu0 0
    %816 = vmatprep.subr.bf16.mxu0 0
    %817 = vmatpush2.bf16.msra.mxu0 0
    %818 = vmatprep.mubr.bf16.mxu0 0
    %819 = vmatmul.mubr.bf16.gmra.mxu0 %v719
    %v820 = vpop.f32.mrf.mxu0
    %v821 = vadd.f32 0.0, %v820
    %v822 = vpop.f32.mrf.mxu0
    %v823 = vpop.f32.mrf.mxu0
    %v824 = vadd.f32 0.0, %v823
    %v825 = vpop.f32.mrf.mxu0
    %826 = vmatprep.mubr.bf16.mxu0 0
    %827 = vmatmul.mubr.bf16.gmra.mxu0 %v720
    %v828 = vpop.f32.mrf.mxu0
    %v829 = vpop.f32.mrf.mxu0
    %v830 = vpop.f32.mrf.mxu0
    %v831 = vpop.f32.mrf.mxu0
    %832 = vdwg.mxu0
    %v833 = vadd.f32 %v704, %v821
    %v834 = vadd.f32 %v707, %v824
    %s835 = scalar_lea.vmem %s3, 1
    %v836 = vld [vmem:[%s835] sm:$0x1]
    %v838 = vlaneseq
    %v839 = vshrl.u32 %v838, 7
    %v840 = vsub.s32 0, %v839
    %v841 = vrot.slane %v836, %v840
    %v843 = vadd.f32 %v833, %v841
    %v844 = vadd.f32 %v834, %v841
    %v845 = vpack.c.bf16 %v844, %v843
    %v846 = vld [vmem:[#allocation9] sm:$0xf]
    %v847 = vld [vmem:[#allocation9 + $0x4] sm:$0xf]
    %v848 = vld [vmem:[#allocation9 + $0x8] sm:$0xf]
    %v849 = vld [vmem:[#allocation9 + $0xc] sm:$0xf]
    %v850 = vld [vmem:[#allocation9 + $0x10] sm:$0xf]
    %v851 = vld [vmem:[#allocation9 + $0x14] sm:$0xf]
    %v852 = vld [vmem:[#allocation9 + $0x18] sm:$0xf]
    %v853 = vld [vmem:[#allocation9 + $0x1c] sm:$0xf]
    %v854 = vld [vmem:[#allocation9 + $0x20] sm:$0xf]
    %v855 = vld [vmem:[#allocation9 + $0x24] sm:$0xf]
    %v856 = vld [vmem:[#allocation9 + $0x28] sm:$0xf]
    %v857 = vld [vmem:[#allocation9 + $0x2c] sm:$0xf]
    %v858 = vld [vmem:[#allocation9 + $0x30] sm:$0xf]
    %v859 = vld [vmem:[#allocation9 + $0x34] sm:$0xf]
    %v860 = vld [vmem:[#allocation9 + $0x38] sm:$0xf]
    %v861 = vld [vmem:[#allocation9 + $0x3c] sm:$0xf]
    %v862 = vld [vmem:[%s5] sm:$0x1]
    %v864 = vlaneseq
    %v865 = vshrl.u32 %v864, 7
    %v866 = vsub.s32 0, %v865
    %v867 = vrot.slane %v862, %v866
    %v885 = vunpack.c.l.b16 %v846
    %v886 = vunpack.c.l.b16 %v847
    %v887 = vunpack.c.l.b16 %v848
    %v888 = vunpack.c.l.b16 %v849
    %v889 = vunpack.c.l.b16 %v850
    %v890 = vunpack.c.l.b16 %v851
    %v891 = vunpack.c.l.b16 %v852
    %v892 = vunpack.c.l.b16 %v853
    %v893 = vunpack.c.l.b16 %v854
    %v894 = vunpack.c.l.b16 %v855
    %v895 = vunpack.c.l.b16 %v856
    %v896 = vunpack.c.l.b16 %v857
    %v897 = vunpack.c.l.b16 %v858
    %v898 = vunpack.c.l.b16 %v859
    %v899 = vunpack.c.l.b16 %v860
    %v900 = vunpack.c.l.b16 %v861
    %v901 = vpack.c.b16 %v886, %v885
    %v902 = vpack.c.b16 %v888, %v887
    %v903 = vpack.c.b16 %v890, %v889
    %v904 = vpack.c.b16 %v892, %v891
    %v905 = vpack.c.b16 %v894, %v893
    %v906 = vpack.c.b16 %v896, %v895
    %v907 = vpack.c.b16 %v898, %v897
    %v908 = vpack.c.b16 %v900, %v899
    %917 = vmatprep.subr.bf16.mxu0 0
    %918 = vmatpush1.bf16.msra.mxu0 %v908
    %919 = vmatprep.subr.bf16.mxu0 0
    %920 = vmatpush1.bf16.msra.mxu0 %v907
    %921 = vmatprep.subr.bf16.mxu0 0
    %922 = vmatpush1.bf16.msra.mxu0 %v906
    %923 = vmatprep.subr.bf16.mxu0 0
    %924 = vmatpush1.bf16.msra.mxu0 %v905
    %925 = vmatprep.subr.bf16.mxu0 0
    %926 = vmatpush1.bf16.msra.mxu0 %v904
    %927 = vmatprep.subr.bf16.mxu0 0
    %928 = vmatpush1.bf16.msra.mxu0 %v903
    %929 = vmatprep.subr.bf16.mxu0 0
    %930 = vmatpush1.bf16.msra.mxu0 %v902
    %931 = vmatprep.subr.bf16.mxu0 0
    %932 = vmatpush1.bf16.msra.mxu0 %v901
    %933 = vmatprep.subr.bf16.mxu0 0
    %934 = vmatpush2.bf16.msra.mxu0 0
    %935 = vmatprep.subr.bf16.mxu0 0
    %936 = vmatpush2.bf16.msra.mxu0 0
    %937 = vmatprep.subr.bf16.mxu0 0
    %938 = vmatpush2.bf16.msra.mxu0 0
    %939 = vmatprep.subr.bf16.mxu0 0
    %940 = vmatpush2.bf16.msra.mxu0 0
    %941 = vmatprep.subr.bf16.mxu0 0
    %942 = vmatpush2.bf16.msra.mxu0 0
    %943 = vmatprep.subr.bf16.mxu0 0
    %944 = vmatpush2.bf16.msra.mxu0 0
    %945 = vmatprep.subr.bf16.mxu0 0
    %946 = vmatpush2.bf16.msra.mxu0 0
    %947 = vmatprep.subr.bf16.mxu0 0
    %948 = vmatpush2.bf16.msra.mxu0 0
    %949 = vmatprep.mubr.bf16.mxu0 0
    %950 = vmatmul.mubr.bf16.gmra.mxu0 %v845
    %v951 = vpop.f32.mrf.mxu0
    %v952 = vadd.f32 %v867, %v951
    %v953 = vpop.f32.mrf.mxu0
    %v954 = vpop.f32.mrf.mxu0
    %v955 = vadd.f32 %v867, %v954
    %v956 = vpop.f32.mrf.mxu0
    %957 = vdwg.mxu0
    %958 = vst [vmem:[#allocation11] sm:$0xff] %v952
    %959 = vst [vmem:[#allocation11 + $0x8] sm:$0xff] %v955
    // Predicated region
    $region42: #{tpu_custom_call.1} parent=1 // pred_check
      _
    $region43: #{tpu_custom_call.1} parent=1 // pred_check_branch
      %961 = sbr.rel (0) target = $region45
    $region44: #{tpu_custom_call.1} parent=1 // pred_region
      %s963 = ssub.s32 256, 256
      %964 = vsyncadd [#allocation5], %s963
      %s965 = sshll.u32 [#allocation11], 4
      %s966 = int_to_ptr.vmem [resolvable:$true] %s965
      %971 = dma.vmem_to_hbm [thread:$0]  %s966, 256, %s6, [#allocation5], 128, 128, 8
    $region45: #{tpu_custom_call.1} parent=1 // pred_fallthru
      _
    // Predicated region
    $region46: #{tpu_custom_call.1} parent=1 // pred_check
      _
    $region47: #{tpu_custom_call.1} parent=1 // pred_check_branch
      %973 = sbr.rel (0) target = $region49
    $region48: #{tpu_custom_call.1} parent=1 // pred_region
      %974 = dma.done [#allocation5], 256
    $region49: #{tpu_custom_call.1} parent=1 // pred_fallthru
      _
    %975 = vsyncpa [#allocation4], 1
    %976 = vsyncpa [#allocation7], 1
    %977 = vsyncpa [#allocation10], 1
    %978 = vsyncpa [#allocation5], 1

</llo_original>
